<compile_context>
chip_gen: v6e
topology: v6e:2x2x1
jax: 0.10.0
libtpu: 0.0.40
codegen_flags: <defaults>
</compile_context>

<pallas_src>
import functools

import jax
import jax.numpy as jnp
from jax.experimental import pallas as pl
from jax.experimental.pallas import tpu as pltpu


def _round_up(n, m):
    return (n + m - 1) // m * m


def center_loss_kernel(labels_ref, x_ref, c_ref, out_ref, gath_ref,
                       *, batch_size, tile_batch, num_classes):
    # labels_ref: (Bp,) int32 in SMEM (scalar prefetch)
    # x_ref:      (TB, D) batch tile (native dtype)
    # c_ref:      (C, D) centers, fully resident in VMEM
    # out_ref:    (1, 1) f32 accumulator / final loss
    # gath_ref:   (TB, D) VMEM scratch holding centers[labels] for this tile
    step = pl.program_id(0)

    @pl.when(step == 0)
    def _():
        out_ref[...] = jnp.zeros_like(out_ref)

    base = step * tile_batch

    # Gather the label's center row for every row of this batch tile.
    @pl.loop(0, tile_batch)
    def _(r):
        lbl = labels_ref[base + r]
        lbl = jnp.clip(lbl, 0, num_classes - 1)  # guard out-of-range labels
        gath_ref[r, :] = c_ref[lbl, :]

    # dist_i = sum_d (x_id - c_{label_i, d})^2  -- exact and non-negative.
    diff = x_ref[...].astype(jnp.float32) - gath_ref[...].astype(jnp.float32)
    dist = jnp.sum(diff * diff, axis=1, keepdims=True)           # (TB, 1)
    dist = jnp.clip(dist, 1e-12, 1e12)

    # Mask rows past the true batch size (wrapper pads B up to a tile multiple).
    rows = base + jax.lax.broadcasted_iota(jnp.int32, (tile_batch, 1), 0)
    dist = jnp.where(rows < batch_size, dist, 0.0)

    out_ref[...] += jnp.sum(dist, keepdims=True)                  # (1, 1)

    @pl.when(step == pl.num_programs(0) - 1)
    def _():
        out_ref[...] = out_ref[...] / jnp.float32(batch_size)


def center_loss(x, centers, labels, *, tile_batch=256):
    """x: (B, D), centers: (C, D), labels: (B,) int -> scalar f32 center loss."""
    B, D = x.shape
    C, Dc = centers.shape
    assert D == Dc, (D, Dc)

    labels = labels.astype(jnp.int32).reshape(B)

    # Batch tile: multiple of 8 (sublane granularity); pad B up to a tile multiple.
    tb = _round_up(min(int(tile_batch), _round_up(B, 8)), 8)
    Bp = _round_up(B, tb)
    if Bp != B:
        x = jnp.pad(x, ((0, Bp - B), (0, 0)))
        labels = jnp.pad(labels, (0, Bp - B))
    num_tiles = Bp // tb

    kernel = functools.partial(
        center_loss_kernel, batch_size=B, tile_batch=tb, num_classes=C)

    out = pl.pallas_call(
        kernel,
        out_shape=jax.ShapeDtypeStruct((1, 1), jnp.float32),
        grid_spec=pltpu.PrefetchScalarGridSpec(
            num_scalar_prefetch=1,                       # labels -> SMEM
            grid=(num_tiles,),
            in_specs=[
                pl.BlockSpec((tb, D), lambda i, lbl: (i, 0)),   # x batch tile
                pl.BlockSpec((C, D), lambda i, lbl: (0, 0)),    # centers resident
            ],
            out_specs=pl.BlockSpec((1, 1), lambda i, lbl: (0, 0)),
            scratch_shapes=[pltpu.VMEM((tb, D), centers.dtype)],
        ),
        compiler_params=pltpu.CompilerParams(
            dimension_semantics=("arbitrary",),          # reduction over batch tiles
        ),
    )(labels, x, centers)
    return out[0, 0]


if __name__ == "__main__":
    num_classes = 10
    feat_dim = 32
    batch = 20  # not a multiple of the tile -> exercises padding/masking

    key = jax.random.PRNGKey(0)
    kx, kc, kl = jax.random.split(key, 3)
    x = jax.random.normal(kx, (batch, feat_dim), dtype=jnp.float32)
    # deterministic "randn" init of the centers parameter (module __init__)
    centers = jax.random.normal(kc, (num_classes, feat_dim), dtype=jnp.float32)
    labels = jax.random.randint(kl, (batch,), 0, num_classes, dtype=jnp.int32)

    # small tile to exercise the multi-step grid path
    loss = center_loss(x, centers, labels, tile_batch=8)
    jax.block_until_ready(loss)

    # pure-JAX reference (gathered-center formulation, same math as the module)
    diff = x - centers[labels]
    ref = jnp.mean(jnp.clip(jnp.sum(diff * diff, axis=1), 1e-12, 1e12))
    assert jnp.allclose(loss, ref, rtol=1e-5, atol=1e-6), (loss, ref)

    print("KERNEL_OK")
</pallas_src>

<mosaic_0001>
module attributes {stable_mosaic.version = 11 : i64} {
  func.func @center_loss_kernel(%arg0: i32, %arg1: memref<24xi32, #tpu.memory_space<smem>>, %arg2: memref<8x32xf32, #tpu.memory_space<vmem>>, %arg3: memref<10x32xf32, #tpu.memory_space<vmem>>, %arg4: memref<1x1xf32, #tpu.memory_space<vmem>>, %arg5: memref<8x32xf32, #tpu.memory_space<vmem>>) attributes {dimension_semantics = [#tpu.dimension_semantics<arbitrary>], iteration_bounds = array<i64: 3>, scalar_prefetch = 1 : i64, scratch_operands = 1 : i64, tpu.core_type = #tpu.core_type<tc>, window_params = [{transform_indices = @transform_0, window_bounds = array<i64: 8, 32>}, {pipeline_mode = #tpu.pipeline_mode<synchronous>, transform_indices = @transform_1, window_bounds = array<i64: 10, 32>}, {pipeline_mode = #tpu.pipeline_mode<synchronous>, transform_indices = @transform_2, window_bounds = array<i64: 1, 1>}]} {
    %c0_i32 = arith.constant 0 : i32
    %0 = arith.cmpi eq, %arg0, %c0_i32 : i32
    %1 = arith.extui %0 : i1 to i32
    %c0_i32_0 = arith.constant 0 : i32
    %2 = arith.cmpi ne, %1, %c0_i32_0 : i32
    scf.if %2 {
      %cst_16 = arith.constant 0.000000e+00 : f32
      %33 = vector.broadcast %cst_16 : f32 to vector<1x1xf32>
      %c0_17 = arith.constant 0 : index
      %c0_18 = arith.constant 0 : index
      %34 = vector.load %arg4[%c0_17, %c0_18] : memref<1x1xf32, #tpu.memory_space<vmem>>, vector<1x1xf32>
      tpu.vector_store %arg4[%c0_17, %c0_18], %33 {strides = array<i32>} : memref<1x1xf32, #tpu.memory_space<vmem>>, vector<1x1xf32>,
    } else {
    }
    %c8_i32 = arith.constant 8 : i32
    %3 = arith.muli %arg0, %c8_i32 : i32
    %c0_i32_1 = arith.constant 0 : i32
    %c8_i32_2 = arith.constant 8 : i32
    %4 = arith.addi %c0_i32_1, %c8_i32_2 : i32
    %c1_i32 = arith.constant 1 : i32
    scf.for %arg6 = %c0_i32_1 to %4 step %c1_i32  : i32 {
      %c1_i32_16 = arith.constant 1 : i32
      %33 = arith.muli %arg6, %c1_i32_16 : i32
      %c0_i32_17 = arith.constant 0 : i32
      %34 = arith.addi %c0_i32_17, %33 : i32
      %35 = arith.addi %3, %34 : i32
      %36 = arith.index_cast %35 : i32 to index
      %37 = memref.load %arg1[%36] : memref<24xi32, #tpu.memory_space<smem>>
      %c0_i32_18 = arith.constant 0 : i32
      %c9_i32 = arith.constant 9 : i32
      %38 = arith.maxsi %c0_i32_18, %37 : i32
      %39 = arith.minsi %c9_i32, %38 : i32
      %40 = arith.index_cast %39 : i32 to index
      %c0_19 = arith.constant 0 : index
      %41 = vector.load %arg3[%40, %c0_19] : memref<10x32xf32, #tpu.memory_space<vmem>>, vector<1x32xf32>
      %42 = vector.shape_cast %41 : vector<1x32xf32> to vector<32xf32>
      %43 = arith.index_cast %34 : i32 to index
      %c0_20 = arith.constant 0 : index
      %44 = vector.load %arg5[%43, %c0_20] : memref<8x32xf32, #tpu.memory_space<vmem>>, vector<1x32xf32>
      %45 = vector.shape_cast %44 : vector<1x32xf32> to vector<32xf32>
      %46 = vector.shape_cast %42 : vector<32xf32> to vector<1x32xf32>
      tpu.vector_store %arg5[%43, %c0_20], %46 {strides = array<i32>} : memref<8x32xf32, #tpu.memory_space<vmem>>, vector<1x32xf32>,
    }
    %c8_i32_3 = arith.constant 8 : i32
    %c0 = arith.constant 0 : index
    %c0_4 = arith.constant 0 : index
    %5 = vector.load %arg2[%c0, %c0_4] : memref<8x32xf32, #tpu.memory_space<vmem>>, vector<8x32xf32>
    %c0_5 = arith.constant 0 : index
    %c0_6 = arith.constant 0 : index
    %6 = vector.load %arg5[%c0_5, %c0_6] : memref<8x32xf32, #tpu.memory_space<vmem>>, vector<8x32xf32>
    %7 = arith.subf %5, %6 : vector<8x32xf32>
    %8 = arith.mulf %7, %7 : vector<8x32xf32>
    %cst = arith.constant dense<0.000000e+00> : vector<8xf32>
    %9 = vector.multi_reduction <add>, %8, %cst [1] : vector<8x32xf32> to vector<8xf32>
    %10 = vector.shape_cast %9 : vector<8xf32> to vector<8x1xf32>
    %cst_7 = arith.constant 9.99999996E-13 : f32
    %cst_8 = arith.constant 9.99999995E+11 : f32
    %11 = vector.broadcast %cst_7 : f32 to vector<8x1xf32>
    %12 = arith.maximumf %11, %10 : vector<8x1xf32>
    %13 = vector.broadcast %cst_8 : f32 to vector<8x1xf32>
    %14 = arith.minimumf %13, %12 : vector<8x1xf32>
    %15 = tpu.iota {dimensions = array<i32: 0>} : vector<8x1xi32>
    %16 = vector.broadcast %3 : i32 to vector<8x1xi32>
    %17 = arith.addi %16, %15 : vector<8x1xi32>
    %c20_i32 = arith.constant 20 : i32
    %18 = vector.broadcast %c20_i32 : i32 to vector<8x1xi32>
    %19 = arith.cmpi slt, %17, %18 : vector<8x1xi32>
    %cst_9 = arith.constant 0.000000e+00 : f32
    %20 = vector.broadcast %cst_9 : f32 to vector<8x1xf32>
    %21 = arith.select %19, %14, %20 : vector<8x1xi1>, vector<8x1xf32>
    %c0_10 = arith.constant 0 : index
    %c0_11 = arith.constant 0 : index
    %22 = vector.load %arg4[%c0_10, %c0_11] : memref<1x1xf32, #tpu.memory_space<vmem>>, vector<1x1xf32>
    %23 = vector.shape_cast %21 : vector<8x1xf32> to vector<1x8x1xf32>
    %cst_12 = arith.constant dense<0.000000e+00> : vector<1xf32>
    %24 = vector.multi_reduction <add>, %23, %cst_12 [1, 2] : vector<1x8x1xf32> to vector<1xf32>
    %25 = vector.shape_cast %24 : vector<1xf32> to vector<1x1x1xf32>
    %26 = vector.extract %25[0, 0, 0] : f32 from vector<1x1x1xf32>
    %27 = vector.broadcast %26 : f32 to vector<1x1xf32>
    %28 = arith.addf %22, %27 : vector<1x1xf32>
    %c0_13 = arith.constant 0 : index
    %c0_14 = arith.constant 0 : index
    %29 = vector.load %arg4[%c0_13, %c0_14] : memref<1x1xf32, #tpu.memory_space<vmem>>, vector<1x1xf32>
    tpu.vector_store %arg4[%c0_13, %c0_14], %28 {strides = array<i32>} : memref<1x1xf32, #tpu.memory_space<vmem>>, vector<1x1xf32>,
    %c2_i32 = arith.constant 2 : i32
    %30 = arith.cmpi eq, %arg0, %c2_i32 : i32
    %31 = arith.extui %30 : i1 to i32
    %c0_i32_15 = arith.constant 0 : i32
    %32 = arith.cmpi ne, %31, %c0_i32_15 : i32
    scf.if %32 {
      %c0_16 = arith.constant 0 : index
      %c0_17 = arith.constant 0 : index
      %33 = vector.load %arg4[%c0_16, %c0_17] : memref<1x1xf32, #tpu.memory_space<vmem>>, vector<1x1xf32>
      %cst_18 = arith.constant 2.000000e+01 : f32
      %34 = vector.broadcast %cst_18 : f32 to vector<1x1xf32>
      %35 = arith.divf %33, %34 : vector<1x1xf32>
      %c0_19 = arith.constant 0 : index
      %c0_20 = arith.constant 0 : index
      %36 = vector.load %arg4[%c0_19, %c0_20] : memref<1x1xf32, #tpu.memory_space<vmem>>, vector<1x1xf32>
      tpu.vector_store %arg4[%c0_19, %c0_20], %35 {strides = array<i32>} : memref<1x1xf32, #tpu.memory_space<vmem>>, vector<1x1xf32>,
    } else {
    }
    return
  }
  func.func @transform_0(%arg0: i32, %arg1: memref<24xi32, #tpu.memory_space<smem>>) -> (i32, i32) {
    %c0_i32 = arith.constant 0 : i32
    %c0_i32_0 = arith.constant 0 : i32
    return %arg0, %c0_i32 : i32, i32
  }
  func.func @transform_1(%arg0: i32, %arg1: memref<24xi32, #tpu.memory_space<smem>>) -> (i32, i32) {
    %c0_i32 = arith.constant 0 : i32
    %c0_i32_0 = arith.constant 0 : i32
    %c0_i32_1 = arith.constant 0 : i32
    return %c0_i32, %c0_i32_0 : i32, i32
  }
  func.func @transform_2(%arg0: i32, %arg1: memref<24xi32, #tpu.memory_space<smem>>) -> (i32, i32) {
    %c0_i32 = arith.constant 0 : i32
    %c0_i32_0 = arith.constant 0 : i32
    %c0_i32_1 = arith.constant 0 : i32
    return %c0_i32, %c0_i32_0 : i32, i32
  }
}

</mosaic_0001>

<llo_original>
// kernel: tpu_custom_call.1
$region0: #{tpu_custom_call.1}
  #allocation0 [shape = 'u32[]', space=smem, size = 0x4, offset = 0x4, fixed_abs, tag = 'smem constant byte address 0x4 - core index']
  #allocation1 [shape = 'u32[144,128]{1,0:T(1,128)}', space=vmem, size = 0x12000, scoped, tag = 'internal scratch']
  #allocation2 [shape = 'f32[8,32]{1,0:T(8,128)}', space=vmem, size = 0x1000, scoped, tag = 'scratch operand']
  #allocation3 [shape = 's32[1]{0}', space=sflag, size = 0x4, scoped, tag = 'scoped memory for tpu_custom_call.1']
  #allocation4 [shape = 'u8[512]{0}', space=smem, size = 0x200, scoped, tag = 'prefetched SMEM operand 0']
  %s0 = inlined_call_operand.hbm [shape: s32[24], index: 0, kind: input, shape index: {}]
  %s1 = inlined_call_operand.hbm [shape: f32[24,32], index: 1, kind: input, shape index: {}]
  %s2 = inlined_call_operand.hbm [shape: f32[10,32], index: 2, kind: input, shape index: {}]
  %s3 = inlined_call_operand.hbm [shape: f32[1,1], index: 3, kind: output, shape index: {}]
  %s4 = sld [smem:[#allocation0]]
  $region64: #{tpu_custom_call.1} parent=0
    _
  %s6 = ssub.s32 1, %s4
  %s7 = scalar_select 0, %s6, %s4
  %9 = dma.hbm_to_smem %s0, 16, [#allocation4], [#allocation3]
  %10 = dma.done [#allocation3], 16
  %11 = sfence
  $region1: #{tpu_custom_call.1} parent=0
    #allocation5 [shape = 'u8[8192]{0}', space=vmem, size = 0x2000, scoped, tag = 'input window, operand 1']
    #allocation6 [shape = 's32[2]{0}', space=sflag, size = 0x8, scoped, tag = 'scoped memory for tpu_custom_call.1']
    #allocation7 [shape = 's32[2]{0}', space=sflag, size = 0x8, scoped, tag = 'scoped memory for tpu_custom_call.1']
    #allocation8 [shape = 'u8[8192]{0}', space=vmem, size = 0x2000, scoped, tag = 'input window, operand 2, single buffered']
    #allocation9 [shape = 's32[1]{0}', space=sflag, size = 0x4, scoped, tag = 'scoped memory for tpu_custom_call.1']
    #allocation10 [shape = 'u8[512]{0}', space=vmem, size = 0x400, scoped, tag = 'output window, operand 0, single buffered']
    %12 = vsyncpa [#allocation6], 0
    %s13 = scalar_lea.sflag [#allocation6], 1
    %14 = vsyncpa %s13, 0
    %15 = vsyncpa [#allocation9], 0
    %16 = vsyncpa [#allocation7], 0
    loop: start=0, step=1, limit=5
    $region2: #{tpu_custom_call.1} parent=1 // loop_pre_header
      _
    $region3: #{tpu_custom_call.1} parent=1 // loop_header
      %s18 = sphi 0, %s22
      %p19 = scmp.ge.s32.totalorder %s18, 5
      %s28 = sphi 0, %s30
      %s31 = sphi 0, %s28
      %s32 = sphi 0, %s31
      %s48 = sphi 0, %s32
      %s52 = sphi 0, %s52
      %s54 = sphi 0, %s52
      %s55 = sphi 0, %s54
      %s69 = sphi 0, %s55
      %s73 = sphi 0, %s73
      %s75 = sphi 0, %s73
      %s76 = sphi 0, %s75
      %s90 = sphi 0, %s76
    $region4: #{tpu_custom_call.1} parent=1 // loop_header_branch
      %21 = sbr.rel (%p19) target = $region8
    $region5: #{tpu_custom_call.1} parent=1 // loop_body
      %s23 = ssub.s32 %s18, 1
      %s24 = ssub.s32 %s18, 2
      %s25 = sadd.s32 %s18, 1
      %s26 = ssub.s32 %s18, %s25
      %p27 = scmp.eq.s32.totalorder %s26, 0
      %s29 = sadd.s32 %s28, 1
      %s30 = scalar_select %p27, %s28, %s29
      %p33 = pneg %p27
      %p34 = scmp.eq.s32.totalorder %s18, 2
      %p35 = por %p33, %p34
      %p36 = scmp.ne.s32.totalorder %s28, %s31
      %p37 = scmp.eq.s32.totalorder %s18, 0
      %p38 = por %p36, %p37
      %p39 = scmp.ne.s32.totalorder %s28, %s31
      %p40 = scmp.eq.s32.totalorder %s23, 2
      %p41 = por %p39, %p40
      %p42 = scmp.ne.s32.totalorder %s31, %s32
      %p43 = scmp.eq.s32.totalorder %s23, 0
      %p44 = por %p42, %p43
      %p45 = scmp.ne.s32.totalorder %s31, %s32
      %p46 = scmp.eq.s32.totalorder %s24, 2
      %p47 = por %p45, %p46
      %p49 = scmp.ne.s32.totalorder %s32, %s48
      %p50 = scmp.eq.s32.totalorder %s24, 0
      %p51 = por %p49, %p50
      %s53 = sadd.s32 %s52, 1
      %p56 = scmp.eq.s32.totalorder %s18, 2
      %p57 = scmp.ne.s32.totalorder %s52, %s54
      %p58 = scmp.eq.s32.totalorder %s18, 0
      %p59 = por %p57, %p58
      %p60 = scmp.ne.s32.totalorder %s52, %s54
      %p61 = scmp.eq.s32.totalorder %s23, 2
      %p62 = por %p60, %p61
      %p63 = scmp.ne.s32.totalorder %s54, %s55
      %p64 = scmp.eq.s32.totalorder %s23, 0
      %p65 = por %p63, %p64
      %p66 = scmp.ne.s32.totalorder %s54, %s55
      %p67 = scmp.eq.s32.totalorder %s24, 2
      %p68 = por %p66, %p67
      %p70 = scmp.ne.s32.totalorder %s55, %s69
      %p71 = scmp.eq.s32.totalorder %s24, 0
      %p72 = por %p70, %p71
      %s74 = sadd.s32 %s73, 1
      %p77 = scmp.eq.s32.totalorder %s18, 2
      %p78 = scmp.ne.s32.totalorder %s73, %s75
      %p79 = scmp.eq.s32.totalorder %s18, 0
      %p80 = por %p78, %p79
      %p81 = scmp.ne.s32.totalorder %s73, %s75
      %p82 = scmp.eq.s32.totalorder %s23, 2
      %p83 = por %p81, %p82
      %p84 = scmp.ne.s32.totalorder %s75, %s76
      %p85 = scmp.eq.s32.totalorder %s23, 0
      %p86 = por %p84, %p85
      %p87 = scmp.ne.s32.totalorder %s75, %s76
      %p88 = scmp.eq.s32.totalorder %s24, 2
      %p89 = por %p87, %p88
      %p91 = scmp.ne.s32.totalorder %s76, %s90
      %p92 = scmp.eq.s32.totalorder %s24, 0
      %p93 = por %p91, %p92
      %p94 = scmp.le.s32.totalorder 1, %s18
      %p95 = scmp.lt.s32.totalorder %s18, 4
      %p96 = pnand %p94, %p95
      %p97 = pneg %p96
      // Predicated region
      $region9: #{tpu_custom_call.1} parent=5 // pred_check
        _
      $region10: #{tpu_custom_call.1} parent=5 // pred_check_branch
        %99 = sbr.rel (%p96) target = $region12
      $region11: #{tpu_custom_call.1} parent=5 // pred_region
        %s100 = ssub.s32 %s18, 1
        // Predicated region
        $region13: #{tpu_custom_call.1} parent=11 // pred_check
          %p101 = pneg %p65
        $region14: #{tpu_custom_call.1} parent=11 // pred_check_branch
          %103 = sbr.rel (%p101) target = $region16
        $region15: #{tpu_custom_call.1} parent=11 // pred_region
          %s105 = ssub.s32 256, 256
          %106 = vsyncadd [#allocation9], %s105
          %s107 = sshll.u32 [#allocation8], 4
          %s108 = int_to_ptr.vmem [resolvable:$true] %s107
          %113 = dma.hbm_to_vmem [thread:$0]  %s2, 256, %s108, [#allocation9], 128, 128, 8
        $region16: #{tpu_custom_call.1} parent=11 // pred_fallthru
          _
      $region12: #{tpu_custom_call.1} parent=5 // pred_fallthru
        _
      %p114 = scmp.lt.s32.totalorder %s18, 3
      // Predicated region
      $region17: #{tpu_custom_call.1} parent=5 // pred_check
        %p115 = pneg %p114
      $region18: #{tpu_custom_call.1} parent=5 // pred_check_branch
        %117 = sbr.rel (%p115) target = $region20
      $region19: #{tpu_custom_call.1} parent=5 // pred_region
        // Predicated region
        $region21: #{tpu_custom_call.1} parent=19 // pred_check
          %p118 = pneg %p38
        $region22: #{tpu_custom_call.1} parent=19 // pred_check_branch
          %120 = sbr.rel (%p118) target = $region24
        $region23: #{tpu_custom_call.1} parent=19 // pred_region
          %s121 = sand.u32 %s28, 1
          %s122 = scalar_lea.sflag [#allocation6], %s121
          %s123 = sand.u32 %s28, 1
          %s124 = smul.addr %s123, 8
          %s125 = scalar_lea.vmem [#allocation5], %s124
          %s127 = ssub.s32 128, 128
          %128 = vsyncadd %s122, %s127
          %s129 = smul.addr %s18, 128
          %s130 = scalar_lea.hbm %s1, %s129
          %s132 = sshll.u32 %s125, 4
          %s133 = int_to_ptr.vmem [resolvable:$true] %s132
          %135 = dma.hbm_to_vmem [thread:$0]  %s130, 128, %s133, %s122
        $region24: #{tpu_custom_call.1} parent=19 // pred_fallthru
          _
      $region20: #{tpu_custom_call.1} parent=5 // pred_fallthru
        _
      %p136 = scmp.le.s32.totalorder 1, %s18
      %p137 = scmp.lt.s32.totalorder %s18, 4
      %p138 = pnand %p136, %p137
      %p139 = pneg %p138
      // Predicated region
      $region25: #{tpu_custom_call.1} parent=5 // pred_check
        _
      $region26: #{tpu_custom_call.1} parent=5 // pred_check_branch
        %141 = sbr.rel (%p138) target = $region28
      $region27: #{tpu_custom_call.1} parent=5 // pred_region
        %s142 = ssub.s32 %s18, 1
        %s143 = sand.u32 %s31, 1
        %s144 = scalar_lea.sflag [#allocation6], %s143
        %s145 = sand.u32 %s31, 1
        %s146 = smul.addr %s145, 8
        %s147 = scalar_lea.vmem [#allocation5], %s146
        // Predicated region
        $region29: #{tpu_custom_call.1} parent=27 // pred_check
          %p148 = pneg %p44
        $region30: #{tpu_custom_call.1} parent=27 // pred_check_branch
          %150 = sbr.rel (%p148) target = $region32
        $region31: #{tpu_custom_call.1} parent=27 // pred_region
          %151 = dma.done %s144, 128
        $region32: #{tpu_custom_call.1} parent=27 // pred_fallthru
          _
        // Predicated region
        $region33: #{tpu_custom_call.1} parent=27 // pred_check
          %p152 = pneg %p65
        $region34: #{tpu_custom_call.1} parent=27 // pred_check_branch
          %154 = sbr.rel (%p152) target = $region36
        $region35: #{tpu_custom_call.1} parent=27 // pred_region
          %155 = dma.done [#allocation9], 256
        $region36: #{tpu_custom_call.1} parent=27 // pred_fallthru
          _
        %s156 = sand.u32 %s31, 1
        %s157 = scalar_lea.sflag [#allocation6], %s156
        %s158 = sand.u32 %s31, 1
        %s159 = smul.addr %s158, 8
        %s160 = scalar_lea.vmem [#allocation5], %s159
        %p161 = pneg %p44
        %p162 = pneg %p41
        %p163 = pneg %p65
        %p164 = pneg %p62
        %p165 = pneg %p86
        %p166 = pneg %p83
        %p167 = scmp.eq.s32.totalorder %s23, 0
        // Predicated region
        $region37: #{tpu_custom_call.1} parent=27 // pred_check
          %p168 = pneg %p167
        $region38: #{tpu_custom_call.1} parent=27 // pred_check_branch
          %170 = sbr.rel (%p168) target = $region40
        $region39: #{tpu_custom_call.1} parent=27 // pred_region
          %vm171 = vcmask 0
          %172 = vst.msk [vmem:[#allocation10] sm:$0x1] %vm171, 0.0
        $region40: #{tpu_custom_call.1} parent=27 // pred_fallthru
          _
        %s173 = smul.u32 %s23, 8
        loop: start=0, step=1, limit=8
        $region41: #{tpu_custom_call.1} parent=27 // loop_pre_header
          _
        $region42: #{tpu_custom_call.1} parent=27 // loop_header
          %s175 = sphi 0, %s179
          %p176 = scmp.ge.s32.totalorder %s175, 8
        $region43: #{tpu_custom_call.1} parent=27 // loop_header_branch
          %178 = sbr.rel (%p176) target = $region47
        $region44: #{tpu_custom_call.1} parent=27 // loop_body
          %s180 = sadd.s32 %s173, %s175
          %s181 = sld [smem:[#allocation4 + %s180]]
          %p182 = scmp.gt.s32.totalorder %s181, 0
          %s183 = scalar_select %p182, %s181, 0
          %p184 = scmp.lt.s32.totalorder %s183, 9
          %s185 = scalar_select %p184, %s183, 9
          %s186 = scalar_lea.vmem [#allocation8], %s185
          %v187 = vld [vmem:[%s186] sm:$0x1]
          %s188 = scalar_lea.vmem [#allocation2], %s175
          %vm189 = vcmask 253952
          %190 = vst.msk [vmem:[%s188] sm:$0x1] %vm189, %v187
        $region45: #{tpu_custom_call.1} parent=27 // loop_footer
          %s179 = sadd.s32 1, %s175
        $region46: #{tpu_custom_call.1} parent=27 // loop_footer_branch
          %174 = sbr.rel target = $region42
        $region47: #{tpu_custom_call.1} parent=27 // loop_exit
          _
        %v191 = vld [vmem:[%s147] sm:$0xff]
        %v192 = vld [vmem:[#allocation2] sm:$0xff]
        %v193 = vsub.f32 %v191, %v192
        %v194 = vmul.f32 %v193, %v193
        %vm195 = vcmask 261120
        %v196 = vsel %vm195, %v194, 0.0
        %197 = vadd.xlane.f32.xlu0 %v196
        %v198 = vpop.xlane.xlu0 %197
        %v199 = vmax.f32 %v198, 1e-12
        %v200 = vmin.f32 %v199, 1e+12
        %v201 = vlaneseq
        %v202 = vshrl.u32 %v201, 7
        %v203 = vstv %s173
        %v204 = vadd.s32 %v203, %v202
        %vm205 = vcmp.lt.s32.totalorder %v204, 20
        %v206 = vsel %vm205, %v200, 0.0
        %v207 = vld [vmem:[#allocation10] sm:$0x1]
        %vm208 = vcmask 7168
        %v209 = vsel %vm208, %v206, 0.0
        %210 = vadd.xlane.f32.xlu0 %v209
        %v211 = vpop.xlane.xlu0 %210
        %v212 = vrot.slane %v211, 4
        %v213 = vadd.f32 %v211, %v212
        %v214 = vrot.slane %v213, 2
        %v215 = vadd.f32 %v213, %v214
        %v216 = vrot.slane %v215, 1
        %v217 = vadd.f32 %v215, %v216
        %s218 = vtos %v217
        %v219 = vstv %s218
        %v220 = vadd.f32 %v207, %v219
        %vm221 = vcmask 0
        %222 = vst.msk [vmem:[#allocation10] sm:$0x1] %vm221, %v220
        %p223 = scmp.eq.s32.totalorder %s23, 2
        // Predicated region
        $region48: #{tpu_custom_call.1} parent=27 // pred_check
          %p224 = pneg %p223
        $region49: #{tpu_custom_call.1} parent=27 // pred_check_branch
          %226 = sbr.rel (%p224) target = $region51
        $region50: #{tpu_custom_call.1} parent=27 // pred_region
          %v227 = vld [vmem:[#allocation10] sm:$0x1]
          %v228 = vrcp.pop 20.0
          %v229 = vmul.f32 %v227, %v228
          %230 = vst.msk [vmem:[#allocation10] sm:$0x1] %vm221, %v229
        $region51: #{tpu_custom_call.1} parent=27 // pred_fallthru
          _
        // Predicated region
        $region52: #{tpu_custom_call.1} parent=27 // pred_check
          %p231 = pneg %p83
        $region53: #{tpu_custom_call.1} parent=27 // pred_check_branch
          %233 = sbr.rel (%p231) target = $region55
        $region54: #{tpu_custom_call.1} parent=27 // pred_region
          %s235 = ssub.s32 16, 16
          %236 = vsyncadd [#allocation7], %s235
          %s238 = sshll.u32 [#allocation10], 4
          %s239 = int_to_ptr.vmem [resolvable:$true] %s238
          %241 = dma.vmem_to_hbm [thread:$0]  %s239, 16, %s3, [#allocation7]
        $region55: #{tpu_custom_call.1} parent=27 // pred_fallthru
          _
        // Predicated region
        $region56: #{tpu_custom_call.1} parent=27 // pred_check
          %p242 = pneg %p83
        $region57: #{tpu_custom_call.1} parent=27 // pred_check_branch
          %244 = sbr.rel (%p242) target = $region59
        $region58: #{tpu_custom_call.1} parent=27 // pred_region
          %245 = dma.done [#allocation7], 16
        $region59: #{tpu_custom_call.1} parent=27 // pred_fallthru
          _
      $region28: #{tpu_custom_call.1} parent=5 // pred_fallthru
        _
      %p246 = scmp.le.s32.totalorder 2, %s18
      // Predicated region
      $region60: #{tpu_custom_call.1} parent=5 // pred_check
        %p247 = pneg %p246
      $region61: #{tpu_custom_call.1} parent=5 // pred_check_branch
        %249 = sbr.rel (%p247) target = $region63
      $region62: #{tpu_custom_call.1} parent=5 // pred_region
        %s250 = ssub.s32 %s18, 2
      $region63: #{tpu_custom_call.1} parent=5 // pred_fallthru
        _
    $region6: #{tpu_custom_call.1} parent=1 // loop_footer
      %s22 = sadd.s32 1, %s18
    $region7: #{tpu_custom_call.1} parent=1 // loop_footer_branch
      %17 = sbr.rel target = $region3
    $region8: #{tpu_custom_call.1} parent=1 // loop_exit
      _
    %251 = vsyncpa [#allocation6], 1
    %s252 = scalar_lea.sflag [#allocation6], 1
    %253 = vsyncpa %s252, 1
    %254 = vsyncpa [#allocation9], 1
    %255 = vsyncpa [#allocation7], 1
    %s256 = scalar_lea.sflag [#allocation7], 1
    %257 = vsyncpa %s256, 1

</llo_original>
